<compile_context>
chip_gen: v5e
topology: v5e:2x2
jax: 0.10.0
libtpu: 0.0.40
codegen_flags: <defaults>
</compile_context>

<pallas_src>
import math

import jax
import jax.numpy as jnp
from jax import lax
from jax.experimental import pallas as pl
from jax.experimental.pallas import tpu as pltpu


def _round_up(x, m):
    return ((x + m - 1) // m) * m


def fixed_embedding_table(c_in, d_model):
    """Matches FixedEmbedding.__init__ (sin on even cols, cos on odd cols)."""
    # Same limitation as the PyTorch original: requires even d_model.
    assert d_model % 2 == 0, "FixedEmbedding requires an even d_model."
    position = jnp.arange(c_in, dtype=jnp.float32)[:, None]                  # (c_in, 1)
    div_term = jnp.exp(
        jnp.arange(0, d_model, 2, dtype=jnp.float32) * (-(math.log(10000.0) / d_model))
    )                                                                         # (d_model//2,)
    w = jnp.zeros((c_in, d_model), dtype=jnp.float32)
    w = w.at[:, 0::2].set(jnp.sin(position * div_term))
    w = w.at[:, 1::2].set(jnp.cos(position * div_term))
    return w


# ---------------------------------------------------------------------------
# Kernel: per (batch, seq-tile)  y = multihot(idx) @ combined_table
#   idx_ref : (1, TL, F) int32  -- feature indices already shifted by table offsets
#   tbl_ref : (TT, Dp)  float32 -- concatenated (zero-padded) embedding tables, VMEM-resident
#   o_ref   : (1, TL, Dp) float32
# ---------------------------------------------------------------------------
def _temporal_embed_kernel(idx_ref, tbl_ref, o_ref):
    idx = idx_ref[0]                                   # (TL, F)
    tl, f = idx.shape
    tt = tbl_ref.shape[0]
    iota = lax.broadcasted_iota(jnp.int32, (tl, tt), 1)          # (TL, TT)
    mh = jnp.zeros((tl, tt), jnp.float32)
    for k in range(f):                                            # static unroll, F <= 5
        mh = mh + (iota == idx[:, k : k + 1]).astype(jnp.float32)
    # One MXU matmul = gather + sum of the F embeddings (f32 exact: 0/1 LHS).
    o_ref[0] = jnp.dot(mh, tbl_ref[...], preferred_element_type=jnp.float32).astype(o_ref.dtype)


def temporal_embedding(x, d_model, embed_type="fixed", freq="h", tables=None, tile_l=512):
    """Forward pass of TemporalEmbedding.

    x : integer array [B, L, C] of time features with columns
        (month, day, weekday, hour[, minute]) -- identical to the PyTorch module.
    Returns float32 [B, L, d_model].
    """
    sizes = [13, 32, 7, 24]          # month_size, day_size, weekday_size, hour_size (cols 0..3)
    if freq == "t":
        sizes.append(4)              # minute_size (col 4)
    F = len(sizes)

    if tables is None:
        # TODO(synk): embed_type != 'fixed' (learned nn.Embedding weights) should supply
        # its weight matrices via `tables=`; the default builds the FixedEmbedding tables.
        tables = [fixed_embedding_table(s, d_model) for s in sizes]

    # Row offsets of each per-feature table inside the combined table.
    offs, acc = [], 0
    for s in sizes:
        offs.append(acc)
        acc += s
    total_rows = acc
    offsets = jnp.asarray(offs, dtype=jnp.int32)

    # Combined, (8,128)-aligned table (tiny: <= 128 x Dp, stays VMEM resident).
    Dp = _round_up(d_model, 128)
    TT = _round_up(total_rows, 128)
    big_table = jnp.zeros((TT, Dp), dtype=jnp.float32)
    row = 0
    for t in tables:
        big_table = big_table.at[row : row + t.shape[0], :d_model].set(t.astype(jnp.float32))
        row += t.shape[0]

    # Shifted indices (cheap elementwise op; no wrapper-side transpose / concat of big data).
    B, L, C = x.shape
    assert C >= F, f"x has {C} feature columns, need {F} for freq={freq!r}"
    idx = x[:, :, :F].astype(jnp.int32) + offsets[None, None, :]              # (B, L, F)

    # Tile the sequence dim: bounded VMEM, enough grid steps to pipeline, both axes parallel.
    TL = min(tile_l, _round_up(L, 8))
    L_pad = _round_up(L, TL)
    if L_pad != L:
        idx = jnp.pad(idx, ((0, 0), (0, L_pad - L), (0, 0)))                  # pad rows -> index 0 (valid), sliced off

    out = pl.pallas_call(
        _temporal_embed_kernel,
        out_shape=jax.ShapeDtypeStruct((B, L_pad, Dp), jnp.float32),
        grid_spec=pltpu.PrefetchScalarGridSpec(
            num_scalar_prefetch=0,
            grid=(B, L_pad // TL),
            in_specs=[
                pl.BlockSpec((1, TL, F), lambda b, t: (b, t, 0)),
                pl.BlockSpec((TT, Dp), lambda b, t: (0, 0)),      # constant block -> fetched once
            ],
            out_specs=pl.BlockSpec((1, TL, Dp), lambda b, t: (b, t, 0)),
        ),
        compiler_params=pltpu.CompilerParams(
            dimension_semantics=("parallel", "parallel"),
        ),
    )(idx, big_table)

    if L_pad != L or Dp != d_model:
        out = out[:, :L, :d_model]
    return out


if __name__ == "__main__":
    # Small shapes consistent with the module: x is [B, L, num_time_features].
    B, L, D = 2, 8, 32

    key = jax.random.PRNGKey(0)
    km, kd, kw, kh, kmin = jax.random.split(key, 5)
    month = jax.random.randint(km, (B, L), 0, 13)
    day = jax.random.randint(kd, (B, L), 0, 32)
    weekday = jax.random.randint(kw, (B, L), 0, 7)
    hour = jax.random.randint(kh, (B, L), 0, 24)
    minute = jax.random.randint(kmin, (B, L), 0, 4)

    # Reference tables (same FixedEmbedding construction).
    month_t = fixed_embedding_table(13, D)
    day_t = fixed_embedding_table(32, D)
    weekday_t = fixed_embedding_table(7, D)
    hour_t = fixed_embedding_table(24, D)
    minute_t = fixed_embedding_table(4, D)

    # --- branch 1: freq='t' (includes minute embedding), columns (month, day, weekday, hour, minute)
    x_t = jnp.stack([month, day, weekday, hour, minute], axis=-1).astype(jnp.int32)   # (B, L, 5)
    out_t = temporal_embedding(x_t, D, embed_type="fixed", freq="t")
    jax.block_until_ready(out_t)
    ref_t = hour_t[hour] + weekday_t[weekday] + day_t[day] + month_t[month] + minute_t[minute]
    assert out_t.shape == (B, L, D)
    assert jnp.allclose(out_t, ref_t, atol=1e-5, rtol=1e-5)

    # --- branch 2: freq='h' (no minute embedding) ---
    x_h = jnp.stack([month, day, weekday, hour], axis=-1).astype(jnp.int32)            # (B, L, 4)
    out_h = temporal_embedding(x_h, D, embed_type="fixed", freq="h")
    jax.block_until_ready(out_h)
    ref_h = hour_t[hour] + weekday_t[weekday] + day_t[day] + month_t[month]
    assert out_h.shape == (B, L, D)
    assert jnp.allclose(out_h, ref_h, atol=1e-5, rtol=1e-5)

    print("KERNEL_OK")
</pallas_src>

<mosaic_0001>
module attributes {stable_mosaic.version = 11 : i64} {
  func.func @_temporal_embed_kernel(%arg0: i32, %arg1: i32, %arg2: memref<1x8x5xi32, #tpu.memory_space<vmem>>, %arg3: memref<128x128xf32, #tpu.memory_space<vmem>>, %arg4: memref<1x8x128xf32, #tpu.memory_space<vmem>>) attributes {dimension_semantics = [#tpu.dimension_semantics<parallel>, #tpu.dimension_semantics<parallel>], iteration_bounds = array<i64: 2, 1>, scalar_prefetch = 0 : i64, scratch_operands = 0 : i64, tpu.core_type = #tpu.core_type<tc>, window_params = [{transform_indices = @transform_0, window_bounds = array<i64: 1, 8, 5>}, {pipeline_mode = #tpu.pipeline_mode<synchronous>, transform_indices = @transform_1, window_bounds = array<i64: 128, 128>}, {transform_indices = @transform_2, window_bounds = array<i64: 1, 8, 128>}]} {
    %c0 = arith.constant 0 : index
    %c0_0 = arith.constant 0 : index
    %c0_1 = arith.constant 0 : index
    %0 = vector.load %arg2[%c0, %c0_0, %c0_1] : memref<1x8x5xi32, #tpu.memory_space<vmem>>, vector<1x8x5xi32>
    %1 = vector.shape_cast %0 : vector<1x8x5xi32> to vector<8x5xi32>
    %2 = tpu.iota {dimensions = array<i32: 1>} : vector<8x128xi32>
    %cst = arith.constant 0.000000e+00 : f32
    %3 = vector.broadcast %cst : f32 to vector<8x128xf32>
    %4 = vector.extract_strided_slice %1 {offsets = [0, 0], sizes = [8, 1], strides = [1, 1]} : vector<8x5xi32> to vector<8x1xi32>
    %5 = vector.broadcast %4 : vector<8x1xi32> to vector<8x128xi32>
    %6 = arith.cmpi eq, %2, %5 : vector<8x128xi32>
    %7 = arith.extui %6 : vector<8x128xi1> to vector<8x128xi32>
    %8 = arith.sitofp %7 : vector<8x128xi32> to vector<8x128xf32>
    %9 = arith.addf %3, %8 : vector<8x128xf32>
    %10 = vector.extract_strided_slice %1 {offsets = [0, 1], sizes = [8, 1], strides = [1, 1]} : vector<8x5xi32> to vector<8x1xi32>
    %11 = vector.broadcast %10 : vector<8x1xi32> to vector<8x128xi32>
    %12 = arith.cmpi eq, %2, %11 : vector<8x128xi32>
    %13 = arith.extui %12 : vector<8x128xi1> to vector<8x128xi32>
    %14 = arith.sitofp %13 : vector<8x128xi32> to vector<8x128xf32>
    %15 = arith.addf %9, %14 : vector<8x128xf32>
    %16 = vector.extract_strided_slice %1 {offsets = [0, 2], sizes = [8, 1], strides = [1, 1]} : vector<8x5xi32> to vector<8x1xi32>
    %17 = vector.broadcast %16 : vector<8x1xi32> to vector<8x128xi32>
    %18 = arith.cmpi eq, %2, %17 : vector<8x128xi32>
    %19 = arith.extui %18 : vector<8x128xi1> to vector<8x128xi32>
    %20 = arith.sitofp %19 : vector<8x128xi32> to vector<8x128xf32>
    %21 = arith.addf %15, %20 : vector<8x128xf32>
    %22 = vector.extract_strided_slice %1 {offsets = [0, 3], sizes = [8, 1], strides = [1, 1]} : vector<8x5xi32> to vector<8x1xi32>
    %23 = vector.broadcast %22 : vector<8x1xi32> to vector<8x128xi32>
    %24 = arith.cmpi eq, %2, %23 : vector<8x128xi32>
    %25 = arith.extui %24 : vector<8x128xi1> to vector<8x128xi32>
    %26 = arith.sitofp %25 : vector<8x128xi32> to vector<8x128xf32>
    %27 = arith.addf %21, %26 : vector<8x128xf32>
    %28 = vector.extract_strided_slice %1 {offsets = [0, 4], sizes = [8, 1], strides = [1, 1]} : vector<8x5xi32> to vector<8x1xi32>
    %29 = vector.broadcast %28 : vector<8x1xi32> to vector<8x128xi32>
    %30 = arith.cmpi eq, %2, %29 : vector<8x128xi32>
    %31 = arith.extui %30 : vector<8x128xi1> to vector<8x128xi32>
    %32 = arith.sitofp %31 : vector<8x128xi32> to vector<8x128xf32>
    %33 = arith.addf %27, %32 : vector<8x128xf32>
    %c0_2 = arith.constant 0 : index
    %c0_3 = arith.constant 0 : index
    %34 = vector.load %arg3[%c0_2, %c0_3] : memref<128x128xf32, #tpu.memory_space<vmem>>, vector<128x128xf32>
    %cst_4 = arith.constant dense<0.000000e+00> : vector<8x128xf32>
    %35 = tpu.matmul %33, %34, %cst_4 {dimension_numbers = #tpu.dot_dimension_numbers<[1], [0], [0], [1], [0, 0, 1, 1], [], []>} : vector<8x128xf32>, vector<128x128xf32>, vector<8x128xf32> -> vector<8x128xf32>
    %c0_5 = arith.constant 0 : index
    %c0_6 = arith.constant 0 : index
    %c0_7 = arith.constant 0 : index
    %36 = vector.load %arg4[%c0_5, %c0_6, %c0_7] : memref<1x8x128xf32, #tpu.memory_space<vmem>>, vector<1x8x128xf32>
    %37 = vector.shape_cast %36 : vector<1x8x128xf32> to vector<8x128xf32>
    %38 = vector.shape_cast %35 : vector<8x128xf32> to vector<1x8x128xf32>
    tpu.vector_store %arg4[%c0_5, %c0_6, %c0_7], %38 {strides = array<i32>} : memref<1x8x128xf32, #tpu.memory_space<vmem>>, vector<1x8x128xf32>,
    return
  }
  func.func @transform_0(%arg0: i32, %arg1: i32) -> (i32, i32, i32) {
    %c0_i32 = arith.constant 0 : i32
    %c0_i32_0 = arith.constant 0 : i32
    return %arg0, %arg1, %c0_i32 : i32, i32, i32
  }
  func.func @transform_1(%arg0: i32, %arg1: i32) -> (i32, i32) {
    %c0_i32 = arith.constant 0 : i32
    %c0_i32_0 = arith.constant 0 : i32
    %c0_i32_1 = arith.constant 0 : i32
    return %c0_i32, %c0_i32_0 : i32, i32
  }
  func.func @transform_2(%arg0: i32, %arg1: i32) -> (i32, i32, i32) {
    %c0_i32 = arith.constant 0 : i32
    %c0_i32_0 = arith.constant 0 : i32
    return %arg0, %arg1, %c0_i32 : i32, i32, i32
  }
}

</mosaic_0001>

<llo_original>
// kernel: tpu_custom_call.1
$region0: #{tpu_custom_call.1}
  #allocation0 [shape = 'u32[]', space=smem, size = 0x4, offset = 0x4, fixed_abs, tag = 'smem constant byte address 0x4 - core index']
  #allocation1 [shape = 'u32[72,128]{1,0:T(1,128)}', space=vmem, size = 0x9000, scoped, tag = 'internal scratch']
  %s0 = inlined_call_operand.vmem [shape: s32[2,8,5], index: 0, kind: input, shape index: {}]
  %s1 = inlined_call_operand.hbm [shape: f32[128,128], index: 1, kind: input, shape index: {}]
  %s2 = inlined_call_operand.hbm [shape: f32[2,8,128], index: 2, kind: output, shape index: {}]
  %s3 = sld [smem:[#allocation0]]
  $region45: #{tpu_custom_call.1} parent=0
    _
  %s5 = ssub.s32 1, %s3
  %s6 = scalar_select 0, %s5, %s3
  $region1: #{tpu_custom_call.1} parent=0
    #allocation2 [shape = 'u8[65536]{0}', space=vmem, size = 0x10000, scoped, tag = 'input window, operand 1, single buffered']
    #allocation3 [shape = 's32[2]{0}', space=sflag, size = 0x8, scoped, tag = 'scoped memory for tpu_custom_call.1']
    #allocation4 [shape = 's32[2]{0}', space=sflag, size = 0x8, scoped, tag = 'scoped memory for tpu_custom_call.1']
    #allocation5 [shape = 'u8[8192]{0}', space=vmem, size = 0x2000, scoped, tag = 'output window, operand 0']
    %7 = vsyncpa [#allocation3], 0
    %8 = vsyncpa [#allocation4], 0
    %s9 = scalar_lea.sflag [#allocation4], 1
    %10 = vsyncpa %s9, 0
    loop: start=0, step=1, limit=4
    $region2: #{tpu_custom_call.1} parent=1 // loop_pre_header
      _
    $region3: #{tpu_custom_call.1} parent=1 // loop_header
      %s12 = sphi 0, %s16
      %p13 = scmp.ge.s32.totalorder %s12, 4
      %s19 = sphi 0, %s31
      %s20 = sphi 0, %s27
      %s21 = sphi 0, %s19
      %s22 = sphi 0, %s20
      %s23 = sphi 0, %s21
      %s24 = sphi 0, %s22
      %s36 = sphi 0, %s38
      %s39 = sphi 0, %s36
      %s40 = sphi 0, %s39
      %s56 = sphi 0, %s40
      %s60 = sphi 0, %s60
      %s62 = sphi 0, %s60
      %s63 = sphi 0, %s62
      %s77 = sphi 0, %s63
      %s85 = sphi 0, %s87
      %s88 = sphi 0, %s85
      %s89 = sphi 0, %s88
      %s105 = sphi 0, %s89
    $region4: #{tpu_custom_call.1} parent=1 // loop_header_branch
      %15 = sbr.rel (%p13) target = $region8
    $region5: #{tpu_custom_call.1} parent=1 // loop_body
      %s17 = ssub.s32 %s12, 1
      %s18 = ssub.s32 %s12, 2
      %s25 = sadd.s32 1, %s20
      %p26 = scmp.ge.s32.totalorder %s25, 1
      %s27 = scalar_select %p26, 0, %s25
      %s28 = sadd.s32 1, %s19
      %s29 = scalar_select %p26, %s28, %s19
      %p30 = scmp.ge.s32.totalorder %s29, 2
      %s31 = scalar_select %p30, 0, %s29
      %s32 = ssub.s32 %s19, %s31
      %s33 = ssub.s32 %s20, %s27
      %s34 = sor.u32 %s32, %s33
      %p35 = scmp.eq.s32.totalorder %s34, 0
      %s37 = sadd.s32 %s36, 1
      %s38 = scalar_select %p35, %s36, %s37
      %p41 = pneg %p35
      %p42 = scmp.eq.s32.totalorder %s12, 1
      %p43 = por %p41, %p42
      %p44 = scmp.ne.s32.totalorder %s36, %s39
      %p45 = scmp.eq.s32.totalorder %s12, 0
      %p46 = por %p44, %p45
      %p47 = scmp.ne.s32.totalorder %s36, %s39
      %p48 = scmp.eq.s32.totalorder %s17, 1
      %p49 = por %p47, %p48
      %p50 = scmp.ne.s32.totalorder %s39, %s40
      %p51 = scmp.eq.s32.totalorder %s17, 0
      %p52 = por %p50, %p51
      %p53 = scmp.ne.s32.totalorder %s39, %s40
      %p54 = scmp.eq.s32.totalorder %s18, 1
      %p55 = por %p53, %p54
      %p57 = scmp.ne.s32.totalorder %s40, %s56
      %p58 = scmp.eq.s32.totalorder %s18, 0
      %p59 = por %p57, %p58
      %s61 = sadd.s32 %s60, 1
      %p64 = scmp.eq.s32.totalorder %s12, 1
      %p65 = scmp.ne.s32.totalorder %s60, %s62
      %p66 = scmp.eq.s32.totalorder %s12, 0
      %p67 = por %p65, %p66
      %p68 = scmp.ne.s32.totalorder %s60, %s62
      %p69 = scmp.eq.s32.totalorder %s17, 1
      %p70 = por %p68, %p69
      %p71 = scmp.ne.s32.totalorder %s62, %s63
      %p72 = scmp.eq.s32.totalorder %s17, 0
      %p73 = por %p71, %p72
      %p74 = scmp.ne.s32.totalorder %s62, %s63
      %p75 = scmp.eq.s32.totalorder %s18, 1
      %p76 = por %p74, %p75
      %p78 = scmp.ne.s32.totalorder %s63, %s77
      %p79 = scmp.eq.s32.totalorder %s18, 0
      %p80 = por %p78, %p79
      %s81 = ssub.s32 %s19, %s31
      %s82 = ssub.s32 %s20, %s27
      %s83 = sor.u32 %s81, %s82
      %p84 = scmp.eq.s32.totalorder %s83, 0
      %s86 = sadd.s32 %s85, 1
      %s87 = scalar_select %p84, %s85, %s86
      %p90 = pneg %p84
      %p91 = scmp.eq.s32.totalorder %s12, 1
      %p92 = por %p90, %p91
      %p93 = scmp.ne.s32.totalorder %s85, %s88
      %p94 = scmp.eq.s32.totalorder %s12, 0
      %p95 = por %p93, %p94
      %p96 = scmp.ne.s32.totalorder %s85, %s88
      %p97 = scmp.eq.s32.totalorder %s17, 1
      %p98 = por %p96, %p97
      %p99 = scmp.ne.s32.totalorder %s88, %s89
      %p100 = scmp.eq.s32.totalorder %s17, 0
      %p101 = por %p99, %p100
      %p102 = scmp.ne.s32.totalorder %s88, %s89
      %p103 = scmp.eq.s32.totalorder %s18, 1
      %p104 = por %p102, %p103
      %p106 = scmp.ne.s32.totalorder %s89, %s105
      %p107 = scmp.eq.s32.totalorder %s18, 0
      %p108 = por %p106, %p107
      %p109 = scmp.le.s32.totalorder 1, %s12
      %p110 = scmp.lt.s32.totalorder %s12, 3
      %p111 = pnand %p109, %p110
      %p112 = pneg %p111
      // Predicated region
      $region9: #{tpu_custom_call.1} parent=5 // pred_check
        _
      $region10: #{tpu_custom_call.1} parent=5 // pred_check_branch
        %114 = sbr.rel (%p111) target = $region12
      $region11: #{tpu_custom_call.1} parent=5 // pred_region
        %s115 = ssub.s32 %s12, 1
        // Predicated region
        $region13: #{tpu_custom_call.1} parent=11 // pred_check
          %p116 = pneg %p73
        $region14: #{tpu_custom_call.1} parent=11 // pred_check_branch
          %118 = sbr.rel (%p116) target = $region16
        $region15: #{tpu_custom_call.1} parent=11 // pred_region
          %120 = vsyncadd [#allocation3], 0
          %s121 = sshll.u32 %s1, 4
          %s122 = int_to_ptr.hbm [resolvable:$true] %s121
          %s123 = sshll.u32 [#allocation2], 4
          %s124 = int_to_ptr.vmem [resolvable:$true] %s123
          %129 = dma.hbm_to_vmem [thread:$0]  %s122, 2048, %s124, [#allocation3], 128, 128, 8
        $region16: #{tpu_custom_call.1} parent=11 // pred_fallthru
          _
      $region12: #{tpu_custom_call.1} parent=5 // pred_fallthru
        _
      %p130 = scmp.lt.s32.totalorder %s12, 2
      // Predicated region
      $region17: #{tpu_custom_call.1} parent=5 // pred_check
        %p131 = pneg %p130
      $region18: #{tpu_custom_call.1} parent=5 // pred_check_branch
        %133 = sbr.rel (%p131) target = $region20
      $region19: #{tpu_custom_call.1} parent=5 // pred_region
        // Predicated region
        $region21: #{tpu_custom_call.1} parent=19 // pred_check
          %p134 = pneg %p46
        $region22: #{tpu_custom_call.1} parent=19 // pred_check_branch
          %136 = sbr.rel (%p134) target = $region24
        $region23: #{tpu_custom_call.1} parent=19 // pred_region
          %p137 = scmp.lt.s32.totalorder %s19, 1
          %s138 = scalar_select %p137, %s19, 1
          %p139 = scmp.lt.s32.totalorder %s20, 0
          %s140 = scalar_select %p139, %s20, 0
          %s141 = sadd.s32 %s140, %s138
          %s142 = smul.addr %s141, 8
          %s143 = scalar_lea.vmem %s0, %s142
        $region24: #{tpu_custom_call.1} parent=19 // pred_fallthru
          _
      $region20: #{tpu_custom_call.1} parent=5 // pred_fallthru
        _
      %p144 = scmp.le.s32.totalorder 1, %s12
      %p145 = scmp.lt.s32.totalorder %s12, 3
      %p146 = pnand %p144, %p145
      %p147 = pneg %p146
      // Predicated region
      $region25: #{tpu_custom_call.1} parent=5 // pred_check
        _
      $region26: #{tpu_custom_call.1} parent=5 // pred_check_branch
        %149 = sbr.rel (%p146) target = $region28
      $region27: #{tpu_custom_call.1} parent=5 // pred_region
        %s150 = ssub.s32 %s12, 1
        // Predicated region
        $region29: #{tpu_custom_call.1} parent=27 // pred_check
          %p151 = pneg %p73
        $region30: #{tpu_custom_call.1} parent=27 // pred_check_branch
          %153 = sbr.rel (%p151) target = $region32
        $region31: #{tpu_custom_call.1} parent=27 // pred_region
          %155 = dma.done [#allocation3], 2048
        $region32: #{tpu_custom_call.1} parent=27 // pred_fallthru
          _
        %p156 = scmp.lt.s32.totalorder %s21, 1
        %s157 = scalar_select %p156, %s21, 1
        %p158 = scmp.lt.s32.totalorder %s22, 0
        %s159 = scalar_select %p158, %s22, 0
        %s160 = sadd.s32 %s159, %s157
        %s161 = smul.addr %s160, 8
        %s162 = scalar_lea.vmem %s0, %s161
        %p163 = pneg %p52
        %p164 = pneg %p49
        %p165 = pneg %p73
        %p166 = pneg %p70
        %p167 = pneg %p101
        %p168 = pneg %p98
        %s169 = sand.u32 %s88, 1
        %s170 = scalar_lea.sflag [#allocation4], %s169
        %s171 = sand.u32 %s88, 1
        %s172 = smul.addr %s171, 8
        %s173 = scalar_lea.vmem [#allocation5], %s172
        %p174 = scmp.lt.s32.totalorder %s21, 1
        %s175 = scalar_select %p174, %s21, 1
        %p176 = scmp.lt.s32.totalorder %s22, 0
        %s177 = scalar_select %p176, %s22, 0
        %s178 = sadd.s32 %s177, %s175
        %s179 = smul.addr %s178, 8
        %s180 = scalar_lea.vmem %s0, %s179
        %v181 = vld [vmem:[%s180] sm:$0xff]
        %v182 = vlaneseq
        %v183 = vand.u32 %v182, 127
        %184 = vset.pattern.permute.xlu0 0
        %185 = vperm.xlu0 %184, %v181
        %v186 = vpop.permute.xlu0 %185
        %vm187 = vcmp.eq.s32.totalorder %v183, %v186
        %v188 = vsel %vm187, 1, 0
        %v189 = vcvt.s32.f32 %v188
        %v190 = vadd.f32 %v189, 0.0
        %191 = vset.pattern.permute.xlu0 1
        %192 = vperm.xlu0 %191, %v181
        %v193 = vpop.permute.xlu0 %192
        %vm194 = vcmp.eq.s32.totalorder %v183, %v193
        %v195 = vsel %vm194, 1, 0
        %v196 = vcvt.s32.f32 %v195
        %v197 = vadd.f32 %v190, %v196
        %198 = vset.pattern.permute.xlu0 2
        %199 = vperm.xlu0 %198, %v181
        %v200 = vpop.permute.xlu0 %199
        %vm201 = vcmp.eq.s32.totalorder %v183, %v200
        %v202 = vsel %vm201, 1, 0
        %v203 = vcvt.s32.f32 %v202
        %v204 = vadd.f32 %v197, %v203
        %205 = vset.pattern.permute.xlu0 3
        %206 = vperm.xlu0 %205, %v181
        %v207 = vpop.permute.xlu0 %206
        %vm208 = vcmp.eq.s32.totalorder %v183, %v207
        %v209 = vsel %vm208, 1, 0
        %v210 = vcvt.s32.f32 %v209
        %v211 = vadd.f32 %v204, %v210
        %212 = vset.pattern.permute.xlu0 4
        %213 = vperm.xlu0 %212, %v181
        %v214 = vpop.permute.xlu0 %213
        %vm215 = vcmp.eq.s32.totalorder %v183, %v214
        %v216 = vsel %vm215, 1, 0
        %v217 = vcvt.s32.f32 %v216
        %v218 = vadd.f32 %v211, %v217
        %v219 = vld [vmem:[#allocation2] sm:$0xff]
        %v220 = vld [vmem:[#allocation2 + $0x8] sm:$0xff]
        %v221 = vld [vmem:[#allocation2 + $0x10] sm:$0xff]
        %v222 = vld [vmem:[#allocation2 + $0x18] sm:$0xff]
        %v223 = vld [vmem:[#allocation2 + $0x20] sm:$0xff]
        %v224 = vld [vmem:[#allocation2 + $0x28] sm:$0xff]
        %v225 = vld [vmem:[#allocation2 + $0x30] sm:$0xff]
        %v226 = vld [vmem:[#allocation2 + $0x38] sm:$0xff]
        %v227 = vld [vmem:[#allocation2 + $0x40] sm:$0xff]
        %v228 = vld [vmem:[#allocation2 + $0x48] sm:$0xff]
        %v229 = vld [vmem:[#allocation2 + $0x50] sm:$0xff]
        %v230 = vld [vmem:[#allocation2 + $0x58] sm:$0xff]
        %v231 = vld [vmem:[#allocation2 + $0x60] sm:$0xff]
        %v232 = vld [vmem:[#allocation2 + $0x68] sm:$0xff]
        %v233 = vld [vmem:[#allocation2 + $0x70] sm:$0xff]
        %v234 = vld [vmem:[#allocation2 + $0x78] sm:$0xff]
        %235 = vmatpush.msra.mxu0 %v234
        %236 = vmatpush.msra.mxu0 %v233
        %237 = vmatpush.msra.mxu0 %v232
        %238 = vmatpush.msra.mxu0 %v231
        %239 = vmatpush.msra.mxu0 %v230
        %240 = vmatpush.msra.mxu0 %v229
        %241 = vmatpush.msra.mxu0 %v228
        %242 = vmatpush.msra.mxu0 %v227
        %243 = vmatpush.msra.mxu0 %v226
        %244 = vmatpush.msra.mxu0 %v225
        %245 = vmatpush.msra.mxu0 %v224
        %246 = vmatpush.msra.mxu0 %v223
        %247 = vmatpush.msra.mxu0 %v222
        %248 = vmatpush.msra.mxu0 %v221
        %249 = vmatpush.msra.mxu0 %v220
        %250 = vmatpush.msra.mxu0 %v219
        %251 = vmatmul.f32.gmra.mxu0 %v218
        %v252 = vpop.f32.mrf.mxu0
        %v253 = vadd.f32 0.0, %v252
        %254 = vdwg.mxu0
        %255 = vst [vmem:[%s173] sm:$0xff] %v253
        %s256 = sand.u32 %s88, 1
        %s257 = scalar_lea.sflag [#allocation4], %s256
        %s258 = sand.u32 %s88, 1
        %s259 = smul.addr %s258, 8
        %s260 = scalar_lea.vmem [#allocation5], %s259
        // Predicated region
        $region33: #{tpu_custom_call.1} parent=27 // pred_check
          %p261 = pneg %p98
        $region34: #{tpu_custom_call.1} parent=27 // pred_check_branch
          %263 = sbr.rel (%p261) target = $region36
        $region35: #{tpu_custom_call.1} parent=27 // pred_region
          %265 = vsyncadd %s257, 0
          %s266 = sadd.s32 %s22, %s21
          %s267 = smul.addr %s266, 8
          %s268 = scalar_lea.hbm %s2, %s267
          %s270 = sshll.u32 %s260, 4
          %s271 = int_to_ptr.vmem [resolvable:$true] %s270
          %s272 = sshll.u32 %s268, 4
          %s273 = int_to_ptr.hbm [resolvable:$true] %s272
          %275 = dma.vmem_to_hbm [thread:$0]  %s271, 128, %s273, %s257
        $region36: #{tpu_custom_call.1} parent=27 // pred_fallthru
          _
      $region28: #{tpu_custom_call.1} parent=5 // pred_fallthru
        _
      %p276 = scmp.le.s32.totalorder 2, %s12
      // Predicated region
      $region37: #{tpu_custom_call.1} parent=5 // pred_check
        %p277 = pneg %p276
      $region38: #{tpu_custom_call.1} parent=5 // pred_check_branch
        %279 = sbr.rel (%p277) target = $region40
      $region39: #{tpu_custom_call.1} parent=5 // pred_region
        %s280 = ssub.s32 %s12, 2
        // Predicated region
        $region41: #{tpu_custom_call.1} parent=39 // pred_check
          %p281 = pneg %p104
        $region42: #{tpu_custom_call.1} parent=39 // pred_check_branch
          %283 = sbr.rel (%p281) target = $region44
        $region43: #{tpu_custom_call.1} parent=39 // pred_region
          %s284 = sand.u32 %s89, 1
          %s285 = scalar_lea.sflag [#allocation4], %s284
          %s286 = sand.u32 %s89, 1
          %s287 = smul.addr %s286, 8
          %s288 = scalar_lea.vmem [#allocation5], %s287
          %290 = dma.done %s285, 128
        $region44: #{tpu_custom_call.1} parent=39 // pred_fallthru
          _
      $region40: #{tpu_custom_call.1} parent=5 // pred_fallthru
        _
    $region6: #{tpu_custom_call.1} parent=1 // loop_footer
      %s16 = sadd.s32 1, %s12
    $region7: #{tpu_custom_call.1} parent=1 // loop_footer_branch
      %11 = sbr.rel target = $region3
    $region8: #{tpu_custom_call.1} parent=1 // loop_exit
      _
    %291 = vsyncpa [#allocation3], 1
    %s292 = scalar_lea.sflag [#allocation3], 1
    %293 = vsyncpa %s292, 1
    %294 = vsyncpa [#allocation4], 1
    %s295 = scalar_lea.sflag [#allocation4], 1
    %296 = vsyncpa %s295, 1

</llo_original>
